<compile_context>
chip_gen: v7x
topology: tpu7x:2x2x1
jax: 0.10.0
libtpu: 0.0.40
codegen_flags: <defaults>
</compile_context>

<pallas_src>
import math
import numpy as np
import jax
import jax.numpy as jnp
from jax.experimental import pallas as pl
from jax.experimental.pallas import tpu as pltpu

# pywt 'haar' filters used by DWT_2D (band_low = rec_lo, band_high = rec_hi).
_S = 1.0 / math.sqrt(2.0)
HAAR_BAND_LOW = np.array([_S, _S], dtype=np.float64)
HAAR_BAND_HIGH = np.array([_S, -_S], dtype=np.float64)


def _dwt_matrices(height, width, dtype=np.float32):
    """Replicates DWT_2D.get_matrix() for the haar wavelet.

    Returns (matrix_low_0, matrix_low_1, matrix_high_0, matrix_high_1):
      matrix_low_0 : (H//2, H)
      matrix_low_1 : (W, W//2)          (already transposed, as in get_matrix)
      matrix_high_0: (H - H//2, H)
      matrix_high_1: (W, W - W//2)
    """
    band_low, band_high = HAAR_BAND_LOW, HAAR_BAND_HIGH
    band_length = len(band_low)
    band_length_half = band_length // 2

    L1 = max(height, width)
    L = L1 // 2
    matrix_h = np.zeros((L, L1 + band_length - 2), dtype=np.float64)
    matrix_g = np.zeros((L1 - L, L1 + band_length - 2), dtype=np.float64)
    end = None if band_length_half == 1 else (-band_length_half + 1)

    index = 0
    for i in range(L):
        for j in range(band_length):
            matrix_h[i, index + j] = band_low[j]
        index += 2
    matrix_h_0 = matrix_h[0:(height // 2), 0:(height + band_length - 2)]
    matrix_h_1 = matrix_h[0:(width // 2), 0:(width + band_length - 2)]

    index = 0
    for i in range(L1 - L):
        for j in range(band_length):
            matrix_g[i, index + j] = band_high[j]
        index += 2
    matrix_g_0 = matrix_g[0:(height - height // 2), 0:(height + band_length - 2)]
    matrix_g_1 = matrix_g[0:(width - width // 2), 0:(width + band_length - 2)]

    matrix_h_0 = matrix_h_0[:, (band_length_half - 1):end]
    matrix_h_1 = matrix_h_1[:, (band_length_half - 1):end]
    matrix_h_1 = np.transpose(matrix_h_1)
    matrix_g_0 = matrix_g_0[:, (band_length_half - 1):end]
    matrix_g_1 = matrix_g_1[:, (band_length_half - 1):end]
    matrix_g_1 = np.transpose(matrix_g_1)

    return (matrix_h_0.astype(dtype), matrix_h_1.astype(dtype),
            matrix_g_0.astype(dtype), matrix_g_1.astype(dtype))


def _dwt2d_kernel(x_ref, m1_ref, out_ref):
    # x_ref : (TC, H//2, 2*W) -- row pairs folded into the lane dim:
    #         x_ref[:, i, :W] is input row 2i, x_ref[:, i, W:] is row 2i+1.
    # m1_ref: (W, W) stacked width filter [matrix_low_1 | matrix_high_1].
    # out_ref: (4, TC, H//2, W//2) -- bands LL, LH, HL, HH.
    two_w = x_ref.shape[-1]
    W = two_w // 2
    w2 = W // 2

    x = x_ref[...]                     # native dtype, single full-tile load
    x_even = x[:, :, :W]               # rows 0, 2, 4, ...
    x_odd = x[:, :, W:]                # rows 1, 3, 5, ...

    # Height (row) stage, closed-form haar on the VPU (no broadcasts, no MXU):
    #   L = matrix_low_0  @ x = (x_even + x_odd) / sqrt(2)
    #   H = matrix_high_0 @ x = (x_even - x_odd) / sqrt(2)
    s = 0.7071067811865476
    l_rows = (x_even + x_odd) * s      # (TC, H//2, W), stays in input dtype
    h_rows = (x_even - x_odd) * s

    # Width (column) stage on the MXU with the stacked filter [ML1 | MH1]:
    m1 = m1_ref[...]
    lo = jnp.matmul(l_rows, m1, preferred_element_type=jnp.float32)
    hi = jnp.matmul(h_rows, m1, preferred_element_type=jnp.float32)

    out_ref[0] = lo[:, :, :w2].astype(out_ref.dtype)   # LL
    out_ref[1] = lo[:, :, w2:].astype(out_ref.dtype)   # LH
    out_ref[2] = hi[:, :, :w2].astype(out_ref.dtype)   # HL
    out_ref[3] = hi[:, :, w2:].astype(out_ref.dtype)   # HH


def downsample_v1(x, *, block_bytes=2 * 1024 * 1024):
    """Downsample_v1.forward == cat(DWT_2D('haar')(x), dim=1)."""
    N, C, H, W = x.shape
    assert H % 2 == 0 and W % 2 == 0, "haar DWT_2D requires even H and W"
    h2, w2 = H // 2, W // 2
    dtype = x.dtype
    itemsize = int(np.dtype(dtype).itemsize)

    # Stacked width filter [matrix_low_1 | matrix_high_1]: (W, W), input dtype.
    _, ml1, _, mh1 = _dwt_matrices(H, W)
    m1 = jnp.asarray(np.concatenate([ml1, mh1], axis=1), dtype=dtype)

    # Channel tile: largest divisor of C whose input block stays <= block_bytes.
    tc_cap = max(1, block_bytes // (H * W * itemsize))
    TC = max(d for d in range(1, C + 1) if C % d == 0 and d <= tc_cap)

    # Fold row pairs into the lane dim (free, contiguous reshape).
    x_r = x.reshape(N, C, h2, 2 * W)

    x_spec = pl.BlockSpec((None, TC, h2, 2 * W), lambda n, c: (n, c, 0, 0))
    m1_spec = pl.BlockSpec((W, W), lambda n, c: (0, 0))
    out_spec = pl.BlockSpec((None, 4, TC, h2, w2), lambda n, c: (n, 0, c, 0, 0))

    # VMEM budget: double-buffered in/out blocks + f32 temporaries + filter.
    est = 10 * TC * H * W * itemsize + 8 * TC * H * W + 4 * W * W * itemsize
    vmem_limit = int(min(max(est + (8 << 20), 32 << 20), 60 << 20))

    out = pl.pallas_call(
        _dwt2d_kernel,
        out_shape=jax.ShapeDtypeStruct((N, 4, C, h2, w2), dtype),
        grid_spec=pltpu.PrefetchScalarGridSpec(
            num_scalar_prefetch=0,
            grid=(N, C // TC),
            in_specs=[x_spec, m1_spec],
            out_specs=out_spec,
        ),
        compiler_params=pltpu.CompilerParams(
            dimension_semantics=("parallel", "parallel"),
            vmem_limit_bytes=vmem_limit,
        ),
    )(x_r, m1)

    # (N, 4, C, h2, w2) -> (N, 4C, h2, w2): free reshape, equals cat(dim=1).
    return out.reshape(N, 4 * C, h2, w2)


if __name__ == "__main__":
    key = jax.random.PRNGKey(0)
    N, C, H, W = 2, 4, 16, 16
    x = jax.random.normal(key, (N, C, H, W), dtype=jnp.float32)

    out = jax.block_until_ready(downsample_v1(x))

    # Pure-JAX reference mirroring DWTFunction_2D.forward + torch.cat(dim=1).
    ml0, ml1, mh0, mh1 = [jnp.asarray(m) for m in _dwt_matrices(H, W)]
    L = jnp.matmul(ml0, x)
    Hh = jnp.matmul(mh0, x)
    LL = jnp.matmul(L, ml1)
    LH = jnp.matmul(L, mh1)
    HL = jnp.matmul(Hh, ml1)
    HH = jnp.matmul(Hh, mh1)
    ref = jnp.concatenate([LL, LH, HL, HH], axis=1)

    assert out.shape == (N, 4 * C, H // 2, W // 2), out.shape
    assert jnp.allclose(out, ref, atol=1e-5, rtol=1e-5), \
        float(jnp.max(jnp.abs(out - ref)))
    print("KERNEL_OK")
</pallas_src>

<mosaic_0001>
module attributes {stable_mosaic.version = 11 : i64} {
  func.func @_dwt2d_kernel(%arg0: i32, %arg1: i32, %arg2: memref<1x4x8x32xf32, #tpu.memory_space<vmem>>, %arg3: memref<16x16xf32, #tpu.memory_space<vmem>>, %arg4: memref<1x4x4x8x8xf32, #tpu.memory_space<vmem>>) attributes {dimension_semantics = [#tpu.dimension_semantics<parallel>, #tpu.dimension_semantics<parallel>], iteration_bounds = array<i64: 2, 1>, scalar_prefetch = 0 : i64, scratch_operands = 0 : i64, tpu.core_type = #tpu.core_type<tc>, window_params = [{transform_indices = @transform_0, window_bounds = array<i64: 1, 4, 8, 32>}, {pipeline_mode = #tpu.pipeline_mode<synchronous>, transform_indices = @transform_1, window_bounds = array<i64: 16, 16>}, {transform_indices = @transform_2, window_bounds = array<i64: 1, 4, 4, 8, 8>}]} {
    %c0 = arith.constant 0 : index
    %c0_0 = arith.constant 0 : index
    %c0_1 = arith.constant 0 : index
    %c0_2 = arith.constant 0 : index
    %0 = vector.load %arg2[%c0, %c0_0, %c0_1, %c0_2] : memref<1x4x8x32xf32, #tpu.memory_space<vmem>>, vector<1x4x8x32xf32>
    %1 = vector.shape_cast %0 : vector<1x4x8x32xf32> to vector<4x8x32xf32>
    %2 = vector.extract_strided_slice %1 {offsets = [0, 0, 0], sizes = [4, 8, 16], strides = [1, 1, 1]} : vector<4x8x32xf32> to vector<4x8x16xf32>
    %3 = vector.extract_strided_slice %1 {offsets = [0, 0, 16], sizes = [4, 8, 16], strides = [1, 1, 1]} : vector<4x8x32xf32> to vector<4x8x16xf32>
    %4 = arith.addf %2, %3 : vector<4x8x16xf32>
    %cst = arith.constant 0.707106769 : f32
    %5 = vector.broadcast %cst : f32 to vector<4x8x16xf32>
    %6 = arith.mulf %4, %5 : vector<4x8x16xf32>
    %7 = arith.subf %2, %3 : vector<4x8x16xf32>
    %cst_3 = arith.constant 0.707106769 : f32
    %8 = vector.broadcast %cst_3 : f32 to vector<4x8x16xf32>
    %9 = arith.mulf %7, %8 : vector<4x8x16xf32>
    %c0_4 = arith.constant 0 : index
    %c0_5 = arith.constant 0 : index
    %10 = vector.load %arg3[%c0_4, %c0_5] : memref<16x16xf32, #tpu.memory_space<vmem>>, vector<16x16xf32>
    %cst_6 = arith.constant dense<0.000000e+00> : vector<4x8x16xf32>
    %11 = tpu.matmul %6, %10, %cst_6 {dimension_numbers = #tpu.dot_dimension_numbers<[2], [0], [0, 1], [1], [0, 0, 0, 1, 1, 1], [], []>} : vector<4x8x16xf32>, vector<16x16xf32>, vector<4x8x16xf32> -> vector<4x8x16xf32>
    %cst_7 = arith.constant dense<0.000000e+00> : vector<4x8x16xf32>
    %12 = tpu.matmul %9, %10, %cst_7 {dimension_numbers = #tpu.dot_dimension_numbers<[2], [0], [0, 1], [1], [0, 0, 0, 1, 1, 1], [], []>} : vector<4x8x16xf32>, vector<16x16xf32>, vector<4x8x16xf32> -> vector<4x8x16xf32>
    %13 = vector.extract_strided_slice %11 {offsets = [0, 0, 0], sizes = [4, 8, 8], strides = [1, 1, 1]} : vector<4x8x16xf32> to vector<4x8x8xf32>
    %c0_8 = arith.constant 0 : index
    %c0_9 = arith.constant 0 : index
    %c0_10 = arith.constant 0 : index
    %c0_11 = arith.constant 0 : index
    %c0_12 = arith.constant 0 : index
    %14 = vector.load %arg4[%c0_8, %c0_9, %c0_10, %c0_11, %c0_12] : memref<1x4x4x8x8xf32, #tpu.memory_space<vmem>>, vector<1x1x4x8x8xf32>
    %15 = vector.shape_cast %14 : vector<1x1x4x8x8xf32> to vector<4x8x8xf32>
    %16 = vector.shape_cast %13 : vector<4x8x8xf32> to vector<1x1x4x8x8xf32>
    tpu.vector_store %arg4[%c0_8, %c0_9, %c0_10, %c0_11, %c0_12], %16 {strides = array<i32>} : memref<1x4x4x8x8xf32, #tpu.memory_space<vmem>>, vector<1x1x4x8x8xf32>,
    %17 = vector.extract_strided_slice %11 {offsets = [0, 0, 8], sizes = [4, 8, 8], strides = [1, 1, 1]} : vector<4x8x16xf32> to vector<4x8x8xf32>
    %c0_13 = arith.constant 0 : index
    %c1 = arith.constant 1 : index
    %c0_14 = arith.constant 0 : index
    %c0_15 = arith.constant 0 : index
    %c0_16 = arith.constant 0 : index
    %18 = vector.load %arg4[%c0_13, %c1, %c0_14, %c0_15, %c0_16] : memref<1x4x4x8x8xf32, #tpu.memory_space<vmem>>, vector<1x1x4x8x8xf32>
    %19 = vector.shape_cast %18 : vector<1x1x4x8x8xf32> to vector<4x8x8xf32>
    %20 = vector.shape_cast %17 : vector<4x8x8xf32> to vector<1x1x4x8x8xf32>
    tpu.vector_store %arg4[%c0_13, %c1, %c0_14, %c0_15, %c0_16], %20 {strides = array<i32>} : memref<1x4x4x8x8xf32, #tpu.memory_space<vmem>>, vector<1x1x4x8x8xf32>,
    %21 = vector.extract_strided_slice %12 {offsets = [0, 0, 0], sizes = [4, 8, 8], strides = [1, 1, 1]} : vector<4x8x16xf32> to vector<4x8x8xf32>
    %c0_17 = arith.constant 0 : index
    %c2 = arith.constant 2 : index
    %c0_18 = arith.constant 0 : index
    %c0_19 = arith.constant 0 : index
    %c0_20 = arith.constant 0 : index
    %22 = vector.load %arg4[%c0_17, %c2, %c0_18, %c0_19, %c0_20] : memref<1x4x4x8x8xf32, #tpu.memory_space<vmem>>, vector<1x1x4x8x8xf32>
    %23 = vector.shape_cast %22 : vector<1x1x4x8x8xf32> to vector<4x8x8xf32>
    %24 = vector.shape_cast %21 : vector<4x8x8xf32> to vector<1x1x4x8x8xf32>
    tpu.vector_store %arg4[%c0_17, %c2, %c0_18, %c0_19, %c0_20], %24 {strides = array<i32>} : memref<1x4x4x8x8xf32, #tpu.memory_space<vmem>>, vector<1x1x4x8x8xf32>,
    %25 = vector.extract_strided_slice %12 {offsets = [0, 0, 8], sizes = [4, 8, 8], strides = [1, 1, 1]} : vector<4x8x16xf32> to vector<4x8x8xf32>
    %c0_21 = arith.constant 0 : index
    %c3 = arith.constant 3 : index
    %c0_22 = arith.constant 0 : index
    %c0_23 = arith.constant 0 : index
    %c0_24 = arith.constant 0 : index
    %26 = vector.load %arg4[%c0_21, %c3, %c0_22, %c0_23, %c0_24] : memref<1x4x4x8x8xf32, #tpu.memory_space<vmem>>, vector<1x1x4x8x8xf32>
    %27 = vector.shape_cast %26 : vector<1x1x4x8x8xf32> to vector<4x8x8xf32>
    %28 = vector.shape_cast %25 : vector<4x8x8xf32> to vector<1x1x4x8x8xf32>
    tpu.vector_store %arg4[%c0_21, %c3, %c0_22, %c0_23, %c0_24], %28 {strides = array<i32>} : memref<1x4x4x8x8xf32, #tpu.memory_space<vmem>>, vector<1x1x4x8x8xf32>,
    return
  }
  func.func @transform_0(%arg0: i32, %arg1: i32) -> (i32, i32, i32, i32) {
    %c0_i32 = arith.constant 0 : i32
    %c0_i32_0 = arith.constant 0 : i32
    %c0_i32_1 = arith.constant 0 : i32
    return %arg0, %arg1, %c0_i32, %c0_i32_0 : i32, i32, i32, i32
  }
  func.func @transform_1(%arg0: i32, %arg1: i32) -> (i32, i32) {
    %c0_i32 = arith.constant 0 : i32
    %c0_i32_0 = arith.constant 0 : i32
    %c0_i32_1 = arith.constant 0 : i32
    return %c0_i32, %c0_i32_0 : i32, i32
  }
  func.func @transform_2(%arg0: i32, %arg1: i32) -> (i32, i32, i32, i32, i32) {
    %c0_i32 = arith.constant 0 : i32
    %c0_i32_0 = arith.constant 0 : i32
    %c0_i32_1 = arith.constant 0 : i32
    %c0_i32_2 = arith.constant 0 : i32
    return %arg0, %c0_i32, %arg1, %c0_i32_0, %c0_i32_1 : i32, i32, i32, i32, i32
  }
}

</mosaic_0001>

<llo_original>
// kernel: tpu_custom_call.1
$region0: #{tpu_custom_call.1}
  #allocation0 [shape = 'u32[]', space=smem, size = 0x4, offset = 0x4, fixed_abs, tag = 'smem constant byte address 0x4 - core index']
  #allocation1 [shape = 'u32[144,128]{1,0:T(1,128)}', space=vmem, size = 0x12000, scoped, tag = 'internal scratch']
  %s0 = inlined_call_operand.hbm [shape: f32[2,4,8,32], index: 0, kind: input, shape index: {}]
  %s1 = inlined_call_operand.hbm [shape: f32[16,16], index: 1, kind: input, shape index: {}]
  %s2 = inlined_call_operand.hbm [shape: f32[2,4,4,8,8], index: 2, kind: output, shape index: {}]
  %s3 = sld [smem:[#allocation0]]
  $region49: #{tpu_custom_call.1} parent=0
    _
  %s5 = ssub.s32 1, %s3
  %s6 = scalar_select 0, %s5, %s3
  $region1: #{tpu_custom_call.1} parent=0
    #allocation2 [shape = 'u8[32768]{0}', space=vmem, size = 0x8000, scoped, tag = 'input window, operand 0']
    #allocation3 [shape = 's32[2]{0}', space=sflag, size = 0x8, scoped, tag = 'scoped memory for tpu_custom_call.1']
    #allocation4 [shape = 's32[2]{0}', space=sflag, size = 0x8, scoped, tag = 'scoped memory for tpu_custom_call.1']
    #allocation5 [shape = 'u8[8192]{0}', space=vmem, size = 0x2000, scoped, tag = 'input window, operand 1, single buffered']
    #allocation6 [shape = 's32[1]{0}', space=sflag, size = 0x4, scoped, tag = 'scoped memory for tpu_custom_call.1']
    #allocation7 [shape = 'u8[131072]{0}', space=vmem, size = 0x20000, scoped, tag = 'output window, operand 0']
    %7 = vsyncpa [#allocation3], 0
    %s8 = scalar_lea.sflag [#allocation3], 1
    %9 = vsyncpa %s8, 0
    %10 = vsyncpa [#allocation6], 0
    %11 = vsyncpa [#allocation4], 0
    %s12 = scalar_lea.sflag [#allocation4], 1
    %13 = vsyncpa %s12, 0
    loop: start=0, step=1, limit=4
    $region2: #{tpu_custom_call.1} parent=1 // loop_pre_header
      _
    $region3: #{tpu_custom_call.1} parent=1 // loop_header
      %s15 = sphi 0, %s19
      %p16 = scmp.ge.s32.totalorder %s15, 4
      %s22 = sphi 0, %s34
      %s23 = sphi 0, %s30
      %s24 = sphi 0, %s22
      %s25 = sphi 0, %s23
      %s26 = sphi 0, %s24
      %s27 = sphi 0, %s25
      %s39 = sphi 0, %s41
      %s42 = sphi 0, %s39
      %s43 = sphi 0, %s42
      %s59 = sphi 0, %s43
      %s63 = sphi 0, %s63
      %s65 = sphi 0, %s63
      %s66 = sphi 0, %s65
      %s80 = sphi 0, %s66
      %s88 = sphi 0, %s90
      %s91 = sphi 0, %s88
      %s92 = sphi 0, %s91
      %s108 = sphi 0, %s92
    $region4: #{tpu_custom_call.1} parent=1 // loop_header_branch
      %18 = sbr.rel (%p16) target = $region8
    $region5: #{tpu_custom_call.1} parent=1 // loop_body
      %s20 = ssub.s32 %s15, 1
      %s21 = ssub.s32 %s15, 2
      %s28 = sadd.s32 1, %s23
      %p29 = scmp.ge.s32.totalorder %s28, 1
      %s30 = scalar_select %p29, 0, %s28
      %s31 = sadd.s32 1, %s22
      %s32 = scalar_select %p29, %s31, %s22
      %p33 = scmp.ge.s32.totalorder %s32, 2
      %s34 = scalar_select %p33, 0, %s32
      %s35 = ssub.s32 %s22, %s34
      %s36 = ssub.s32 %s23, %s30
      %s37 = sor.u32 %s35, %s36
      %p38 = scmp.eq.s32.totalorder %s37, 0
      %s40 = sadd.s32 %s39, 1
      %s41 = scalar_select %p38, %s39, %s40
      %p44 = pneg %p38
      %p45 = scmp.eq.s32.totalorder %s15, 1
      %p46 = por %p44, %p45
      %p47 = scmp.ne.s32.totalorder %s39, %s42
      %p48 = scmp.eq.s32.totalorder %s15, 0
      %p49 = por %p47, %p48
      %p50 = scmp.ne.s32.totalorder %s39, %s42
      %p51 = scmp.eq.s32.totalorder %s20, 1
      %p52 = por %p50, %p51
      %p53 = scmp.ne.s32.totalorder %s42, %s43
      %p54 = scmp.eq.s32.totalorder %s20, 0
      %p55 = por %p53, %p54
      %p56 = scmp.ne.s32.totalorder %s42, %s43
      %p57 = scmp.eq.s32.totalorder %s21, 1
      %p58 = por %p56, %p57
      %p60 = scmp.ne.s32.totalorder %s43, %s59
      %p61 = scmp.eq.s32.totalorder %s21, 0
      %p62 = por %p60, %p61
      %s64 = sadd.s32 %s63, 1
      %p67 = scmp.eq.s32.totalorder %s15, 1
      %p68 = scmp.ne.s32.totalorder %s63, %s65
      %p69 = scmp.eq.s32.totalorder %s15, 0
      %p70 = por %p68, %p69
      %p71 = scmp.ne.s32.totalorder %s63, %s65
      %p72 = scmp.eq.s32.totalorder %s20, 1
      %p73 = por %p71, %p72
      %p74 = scmp.ne.s32.totalorder %s65, %s66
      %p75 = scmp.eq.s32.totalorder %s20, 0
      %p76 = por %p74, %p75
      %p77 = scmp.ne.s32.totalorder %s65, %s66
      %p78 = scmp.eq.s32.totalorder %s21, 1
      %p79 = por %p77, %p78
      %p81 = scmp.ne.s32.totalorder %s66, %s80
      %p82 = scmp.eq.s32.totalorder %s21, 0
      %p83 = por %p81, %p82
      %s84 = ssub.s32 %s22, %s34
      %s85 = ssub.s32 %s23, %s30
      %s86 = sor.u32 %s84, %s85
      %p87 = scmp.eq.s32.totalorder %s86, 0
      %s89 = sadd.s32 %s88, 1
      %s90 = scalar_select %p87, %s88, %s89
      %p93 = pneg %p87
      %p94 = scmp.eq.s32.totalorder %s15, 1
      %p95 = por %p93, %p94
      %p96 = scmp.ne.s32.totalorder %s88, %s91
      %p97 = scmp.eq.s32.totalorder %s15, 0
      %p98 = por %p96, %p97
      %p99 = scmp.ne.s32.totalorder %s88, %s91
      %p100 = scmp.eq.s32.totalorder %s20, 1
      %p101 = por %p99, %p100
      %p102 = scmp.ne.s32.totalorder %s91, %s92
      %p103 = scmp.eq.s32.totalorder %s20, 0
      %p104 = por %p102, %p103
      %p105 = scmp.ne.s32.totalorder %s91, %s92
      %p106 = scmp.eq.s32.totalorder %s21, 1
      %p107 = por %p105, %p106
      %p109 = scmp.ne.s32.totalorder %s92, %s108
      %p110 = scmp.eq.s32.totalorder %s21, 0
      %p111 = por %p109, %p110
      %p112 = scmp.le.s32.totalorder 1, %s15
      %p113 = scmp.lt.s32.totalorder %s15, 3
      %p114 = pnand %p112, %p113
      %p115 = pneg %p114
      // Predicated region
      $region9: #{tpu_custom_call.1} parent=5 // pred_check
        _
      $region10: #{tpu_custom_call.1} parent=5 // pred_check_branch
        %117 = sbr.rel (%p114) target = $region12
      $region11: #{tpu_custom_call.1} parent=5 // pred_region
        %s118 = ssub.s32 %s15, 1
        // Predicated region
        $region13: #{tpu_custom_call.1} parent=11 // pred_check
          %p119 = pneg %p76
        $region14: #{tpu_custom_call.1} parent=11 // pred_check_branch
          %121 = sbr.rel (%p119) target = $region16
        $region15: #{tpu_custom_call.1} parent=11 // pred_region
          %s123 = ssub.s32 256, 256
          %124 = vsyncadd [#allocation6], %s123
          %s125 = sshll.u32 [#allocation5], 4
          %s126 = int_to_ptr.vmem [resolvable:$true] %s125
          %131 = dma.hbm_to_vmem [thread:$0]  %s1, 256, %s126, [#allocation6], 128, 128, 8
        $region16: #{tpu_custom_call.1} parent=11 // pred_fallthru
          _
      $region12: #{tpu_custom_call.1} parent=5 // pred_fallthru
        _
      %p132 = scmp.lt.s32.totalorder %s15, 2
      // Predicated region
      $region17: #{tpu_custom_call.1} parent=5 // pred_check
        %p133 = pneg %p132
      $region18: #{tpu_custom_call.1} parent=5 // pred_check_branch
        %135 = sbr.rel (%p133) target = $region20
      $region19: #{tpu_custom_call.1} parent=5 // pred_region
        // Predicated region
        $region21: #{tpu_custom_call.1} parent=19 // pred_check
          %p136 = pneg %p49
        $region22: #{tpu_custom_call.1} parent=19 // pred_check_branch
          %138 = sbr.rel (%p136) target = $region24
        $region23: #{tpu_custom_call.1} parent=19 // pred_region
          %s139 = sand.u32 %s39, 1
          %s140 = scalar_lea.sflag [#allocation3], %s139
          %s141 = sand.u32 %s39, 1
          %s142 = smul.addr %s141, 32
          %s143 = scalar_lea.vmem [#allocation2], %s142
          %s144 = smul.u32 4, %s23
          %s146 = ssub.s32 512, 512
          %147 = vsyncadd %s140, %s146
          %s148 = smul.addr %s22, 4
          %s149 = sadd.s32 %s144, %s148
          %s150 = smul.addr %s149, 128
          %s151 = scalar_lea.hbm %s0, %s150
          %s152 = sshll.u32 %s143, 4
          %s153 = int_to_ptr.vmem [resolvable:$true] %s152
          %158 = dma.hbm_to_vmem [thread:$0]  %s151, 512, %s153, %s140, 128, 128, 8
        $region24: #{tpu_custom_call.1} parent=19 // pred_fallthru
          _
      $region20: #{tpu_custom_call.1} parent=5 // pred_fallthru
        _
      %p159 = scmp.le.s32.totalorder 1, %s15
      %p160 = scmp.lt.s32.totalorder %s15, 3
      %p161 = pnand %p159, %p160
      %p162 = pneg %p161
      // Predicated region
      $region25: #{tpu_custom_call.1} parent=5 // pred_check
        _
      $region26: #{tpu_custom_call.1} parent=5 // pred_check_branch
        %164 = sbr.rel (%p161) target = $region28
      $region27: #{tpu_custom_call.1} parent=5 // pred_region
        %s165 = ssub.s32 %s15, 1
        %s166 = sand.u32 %s42, 1
        %s167 = scalar_lea.sflag [#allocation3], %s166
        %s168 = sand.u32 %s42, 1
        %s169 = smul.addr %s168, 32
        %s170 = scalar_lea.vmem [#allocation2], %s169
        // Predicated region
        $region29: #{tpu_custom_call.1} parent=27 // pred_check
          %p171 = pneg %p55
        $region30: #{tpu_custom_call.1} parent=27 // pred_check_branch
          %173 = sbr.rel (%p171) target = $region32
        $region31: #{tpu_custom_call.1} parent=27 // pred_region
          %174 = dma.done %s167, 512
        $region32: #{tpu_custom_call.1} parent=27 // pred_fallthru
          _
        // Predicated region
        $region33: #{tpu_custom_call.1} parent=27 // pred_check
          %p175 = pneg %p76
        $region34: #{tpu_custom_call.1} parent=27 // pred_check_branch
          %177 = sbr.rel (%p175) target = $region36
        $region35: #{tpu_custom_call.1} parent=27 // pred_region
          %178 = dma.done [#allocation6], 256
        $region36: #{tpu_custom_call.1} parent=27 // pred_fallthru
          _
        %s179 = sand.u32 %s42, 1
        %s180 = scalar_lea.sflag [#allocation3], %s179
        %s181 = sand.u32 %s42, 1
        %s182 = smul.addr %s181, 32
        %s183 = scalar_lea.vmem [#allocation2], %s182
        %p184 = pneg %p55
        %p185 = pneg %p52
        %p186 = pneg %p76
        %p187 = pneg %p73
        %p188 = pneg %p104
        %p189 = pneg %p101
        %s190 = sand.u32 %s91, 1
        %s191 = scalar_lea.sflag [#allocation4], %s190
        %s192 = sand.u32 %s91, 1
        %s193 = smul.addr %s192, 128
        %s194 = scalar_lea.vmem [#allocation7], %s193
        %s195 = smul.u32 4, %s25
        %s196 = smul.u32 4, %s25
        %v197 = vld [vmem:[%s170] sm:$0xff]
        %v198 = vld [vmem:[%s170 + $0x8] sm:$0xff]
        %v199 = vld [vmem:[%s170 + $0x10] sm:$0xff]
        %v200 = vld [vmem:[%s170 + $0x18] sm:$0xff]
        %205 = vrot.lane.b32.xlu0 %v197, 112
        %v206 = vpop.permute.xlu0 %205
        %207 = vrot.lane.b32.xlu0 %v198, 112
        %v208 = vpop.permute.xlu0 %207
        %209 = vrot.lane.b32.xlu0 %v199, 112
        %v210 = vpop.permute.xlu0 %209
        %211 = vrot.lane.b32.xlu0 %v200, 112
        %v212 = vpop.permute.xlu0 %211
        %v217 = vadd.f32 %v197, %v206
        %v218 = vadd.f32 %v198, %v208
        %v219 = vadd.f32 %v199, %v210
        %v220 = vadd.f32 %v200, %v212
        %v221 = vmul.f32 %v217, 0.70710677
        %v222 = vmul.f32 %v218, 0.70710677
        %v223 = vmul.f32 %v219, 0.70710677
        %v224 = vmul.f32 %v220, 0.70710677
        %v225 = vsub.f32 %v197, %v206
        %v226 = vsub.f32 %v198, %v208
        %v227 = vsub.f32 %v199, %v210
        %v228 = vsub.f32 %v200, %v212
        %v229 = vmul.f32 %v225, 0.70710677
        %v230 = vmul.f32 %v226, 0.70710677
        %v231 = vmul.f32 %v227, 0.70710677
        %v232 = vmul.f32 %v228, 0.70710677
        %v233 = vld [vmem:[#allocation5] sm:$0xff]
        %v234 = vld [vmem:[#allocation5 + $0x8] sm:$0xff]
        %vm235 = vcmask 130048
        %v237 = vsel %vm235, %v221, 0
        %v240 = vsel %vm235, %v222, 0
        %v243 = vsel %vm235, %v223, 0
        %v246 = vsel %vm235, %v224, 0
        %248 = vmatprep.subr.mxu0 0.0
        %249 = vmatpush1.msra.mxu0 %v233
        %250 = vmatprep.subr.mxu0 0.0
        %251 = vmatpush1.msra.mxu0 %v234
        %252 = vmatprep.subr.mxu0 0.0
        %253 = vmatpush1.msra.mxu0 0.0
        %254 = vmatprep.subr.mxu0 0.0
        %255 = vmatpush1.msra.mxu0 0.0
        %256 = vmatprep.subr.mxu0 0.0
        %257 = vmatpush1.msra.mxu0 0.0
        %258 = vmatprep.subr.mxu0 0.0
        %259 = vmatpush1.msra.mxu0 0.0
        %260 = vmatprep.subr.mxu0 0.0
        %261 = vmatpush1.msra.mxu0 0.0
        %262 = vmatprep.subr.mxu0 0.0
        %263 = vmatpush1.msra.mxu0 0.0
        %264 = vmatprep.subr.mxu0 0.0
        %265 = vmatpush1.msra.mxu0 0.0
        %266 = vmatprep.subr.mxu0 0.0
        %267 = vmatpush1.msra.mxu0 0.0
        %268 = vmatprep.subr.mxu0 0.0
        %269 = vmatpush1.msra.mxu0 0.0
        %270 = vmatprep.subr.mxu0 0.0
        %271 = vmatpush1.msra.mxu0 0.0
        %272 = vmatprep.subr.mxu0 0.0
        %273 = vmatpush1.msra.mxu0 0.0
        %274 = vmatprep.subr.mxu0 0.0
        %275 = vmatpush1.msra.mxu0 0.0
        %276 = vmatprep.subr.mxu0 0.0
        %277 = vmatpush1.msra.mxu0 0.0
        %278 = vmatprep.subr.mxu0 0.0
        %279 = vmatpush1.msra.mxu0 0.0
        %280 = vmatprep.subr.mxu0 0.0
        %281 = vmatpush1.msra.mxu0 0.0
        %282 = vmatprep.subr.mxu0 0.0
        %283 = vmatpush1.msra.mxu0 0.0
        %284 = vmatprep.subr.mxu0 0.0
        %285 = vmatpush1.msra.mxu0 0.0
        %286 = vmatprep.subr.mxu0 0.0
        %287 = vmatpush1.msra.mxu0 0.0
        %288 = vmatprep.subr.mxu0 0.0
        %289 = vmatpush1.msra.mxu0 0.0
        %290 = vmatprep.subr.mxu0 0.0
        %291 = vmatpush1.msra.mxu0 0.0
        %292 = vmatprep.subr.mxu0 0.0
        %293 = vmatpush1.msra.mxu0 0.0
        %294 = vmatprep.subr.mxu0 0.0
        %295 = vmatpush1.msra.mxu0 0.0
        %296 = vmatprep.subr.mxu0 0.0
        %297 = vmatpush1.msra.mxu0 0.0
        %298 = vmatprep.subr.mxu0 0.0
        %299 = vmatpush1.msra.mxu0 0.0
        %300 = vmatprep.subr.mxu0 0.0
        %301 = vmatpush1.msra.mxu0 0.0
        %302 = vmatprep.subr.mxu0 0.0
        %303 = vmatpush1.msra.mxu0 0.0
        %304 = vmatprep.subr.mxu0 0.0
        %305 = vmatpush1.msra.mxu0 0.0
        %306 = vmatprep.subr.mxu0 0.0
        %307 = vmatpush1.msra.mxu0 0.0
        %308 = vmatprep.subr.mxu0 0.0
        %309 = vmatpush1.msra.mxu0 0.0
        %310 = vmatprep.subr.mxu0 0.0
        %311 = vmatpush1.msra.mxu0 0.0
        %312 = vmatprep.mubr.f32.mxu0 0.0
        %313 = vmatmul.mubr.f32.gmra.mrb[0].mxu0 %v237
        %v314 = vpop.f32.mrb[0].mxu0
        %v315 = vadd.f32 0.0, %v314
        %v316 = vpop.f32.mrb[0].mxu0
        %317 = vmatprep.mubr.f32.mxu0 0.0
        %318 = vmatmul.mubr.f32.gmra.mrb[0].mxu0 %v240
        %v319 = vpop.f32.mrb[0].mxu0
        %v320 = vadd.f32 0.0, %v319
        %v321 = vpop.f32.mrb[0].mxu0
        %322 = vmatprep.mubr.f32.mxu0 0.0
        %323 = vmatmul.mubr.f32.gmra.mrb[0].mxu0 %v243
        %v324 = vpop.f32.mrb[0].mxu0
        %v325 = vadd.f32 0.0, %v324
        %v326 = vpop.f32.mrb[0].mxu0
        %327 = vmatprep.mubr.f32.mxu0 0.0
        %328 = vmatmul.mubr.f32.gmra.mrb[0].mxu0 %v246
        %v329 = vpop.f32.mrb[0].mxu0
        %v330 = vadd.f32 0.0, %v329
        %v331 = vpop.f32.mrb[0].mxu0
        %332 = vdwg.mxu0
        %v334 = vsel %vm235, %v229, 0
        %v337 = vsel %vm235, %v230, 0
        %v340 = vsel %vm235, %v231, 0
        %v343 = vsel %vm235, %v232, 0
        %345 = vmatprep.subr.mxu0 0.0
        %346 = vmatpush1.msra.mxu0 %v233
        %347 = vmatprep.subr.mxu0 0.0
        %348 = vmatpush1.msra.mxu0 %v234
        %349 = vmatprep.subr.mxu0 0.0
        %350 = vmatpush1.msra.mxu0 0.0
        %351 = vmatprep.subr.mxu0 0.0
        %352 = vmatpush1.msra.mxu0 0.0
        %353 = vmatprep.subr.mxu0 0.0
        %354 = vmatpush1.msra.mxu0 0.0
        %355 = vmatprep.subr.mxu0 0.0
        %356 = vmatpush1.msra.mxu0 0.0
        %357 = vmatprep.subr.mxu0 0.0
        %358 = vmatpush1.msra.mxu0 0.0
        %359 = vmatprep.subr.mxu0 0.0
        %360 = vmatpush1.msra.mxu0 0.0
        %361 = vmatprep.subr.mxu0 0.0
        %362 = vmatpush1.msra.mxu0 0.0
        %363 = vmatprep.subr.mxu0 0.0
        %364 = vmatpush1.msra.mxu0 0.0
        %365 = vmatprep.subr.mxu0 0.0
        %366 = vmatpush1.msra.mxu0 0.0
        %367 = vmatprep.subr.mxu0 0.0
        %368 = vmatpush1.msra.mxu0 0.0
        %369 = vmatprep.subr.mxu0 0.0
        %370 = vmatpush1.msra.mxu0 0.0
        %371 = vmatprep.subr.mxu0 0.0
        %372 = vmatpush1.msra.mxu0 0.0
        %373 = vmatprep.subr.mxu0 0.0
        %374 = vmatpush1.msra.mxu0 0.0
        %375 = vmatprep.subr.mxu0 0.0
        %376 = vmatpush1.msra.mxu0 0.0
        %377 = vmatprep.subr.mxu0 0.0
        %378 = vmatpush1.msra.mxu0 0.0
        %379 = vmatprep.subr.mxu0 0.0
        %380 = vmatpush1.msra.mxu0 0.0
        %381 = vmatprep.subr.mxu0 0.0
        %382 = vmatpush1.msra.mxu0 0.0
        %383 = vmatprep.subr.mxu0 0.0
        %384 = vmatpush1.msra.mxu0 0.0
        %385 = vmatprep.subr.mxu0 0.0
        %386 = vmatpush1.msra.mxu0 0.0
        %387 = vmatprep.subr.mxu0 0.0
        %388 = vmatpush1.msra.mxu0 0.0
        %389 = vmatprep.subr.mxu0 0.0
        %390 = vmatpush1.msra.mxu0 0.0
        %391 = vmatprep.subr.mxu0 0.0
        %392 = vmatpush1.msra.mxu0 0.0
        %393 = vmatprep.subr.mxu0 0.0
        %394 = vmatpush1.msra.mxu0 0.0
        %395 = vmatprep.subr.mxu0 0.0
        %396 = vmatpush1.msra.mxu0 0.0
        %397 = vmatprep.subr.mxu0 0.0
        %398 = vmatpush1.msra.mxu0 0.0
        %399 = vmatprep.subr.mxu0 0.0
        %400 = vmatpush1.msra.mxu0 0.0
        %401 = vmatprep.subr.mxu0 0.0
        %402 = vmatpush1.msra.mxu0 0.0
        %403 = vmatprep.subr.mxu0 0.0
        %404 = vmatpush1.msra.mxu0 0.0
        %405 = vmatprep.subr.mxu0 0.0
        %406 = vmatpush1.msra.mxu0 0.0
        %407 = vmatprep.subr.mxu0 0.0
        %408 = vmatpush1.msra.mxu0 0.0
        %409 = vmatprep.mubr.f32.mxu0 0.0
        %410 = vmatmul.mubr.f32.gmra.mrb[0].mxu0 %v334
        %v411 = vpop.f32.mrb[0].mxu0
        %v412 = vadd.f32 0.0, %v411
        %v413 = vpop.f32.mrb[0].mxu0
        %414 = vmatprep.mubr.f32.mxu0 0.0
        %415 = vmatmul.mubr.f32.gmra.mrb[0].mxu0 %v337
        %v416 = vpop.f32.mrb[0].mxu0
        %v417 = vadd.f32 0.0, %v416
        %v418 = vpop.f32.mrb[0].mxu0
        %419 = vmatprep.mubr.f32.mxu0 0.0
        %420 = vmatmul.mubr.f32.gmra.mrb[0].mxu0 %v340
        %v421 = vpop.f32.mrb[0].mxu0
        %v422 = vadd.f32 0.0, %v421
        %v423 = vpop.f32.mrb[0].mxu0
        %424 = vmatprep.mubr.f32.mxu0 0.0
        %425 = vmatmul.mubr.f32.gmra.mrb[0].mxu0 %v343
        %v426 = vpop.f32.mrb[0].mxu0
        %v427 = vadd.f32 0.0, %v426
        %v428 = vpop.f32.mrb[0].mxu0
        %429 = vdwg.mxu0
        %vm430 = vcmask 64512
        %431 = vst.msk [vmem:[%s194] sm:$0xff] %vm430, %v315
        %432 = vst.msk [vmem:[%s194 + $0x8] sm:$0xff] %vm430, %v320
        %433 = vst.msk [vmem:[%s194 + $0x10] sm:$0xff] %vm430, %v325
        %434 = vst.msk [vmem:[%s194 + $0x18] sm:$0xff] %vm430, %v330
        %439 = vrot.lane.b32.xlu0 %v315, 120
        %v440 = vpop.permute.xlu0 %439
        %441 = vrot.lane.b32.xlu0 %v320, 120
        %v442 = vpop.permute.xlu0 %441
        %443 = vrot.lane.b32.xlu0 %v325, 120
        %v444 = vpop.permute.xlu0 %443
        %445 = vrot.lane.b32.xlu0 %v330, 120
        %v446 = vpop.permute.xlu0 %445
        %s451 = scalar_lea.vmem %s194, 32 [#allocation7]
        %452 = vst.msk [vmem:[%s451] sm:$0xff] %vm430, %v440
        %453 = vst.msk [vmem:[%s451 + $0x8] sm:$0xff] %vm430, %v442
        %454 = vst.msk [vmem:[%s451 + $0x10] sm:$0xff] %vm430, %v444
        %455 = vst.msk [vmem:[%s451 + $0x18] sm:$0xff] %vm430, %v446
        %s456 = scalar_lea.vmem %s194, 64 [#allocation7]
        %457 = vst.msk [vmem:[%s456] sm:$0xff] %vm430, %v412
        %458 = vst.msk [vmem:[%s456 + $0x8] sm:$0xff] %vm430, %v417
        %459 = vst.msk [vmem:[%s456 + $0x10] sm:$0xff] %vm430, %v422
        %460 = vst.msk [vmem:[%s456 + $0x18] sm:$0xff] %vm430, %v427
        %465 = vrot.lane.b32.xlu0 %v412, 120
        %v466 = vpop.permute.xlu0 %465
        %467 = vrot.lane.b32.xlu0 %v417, 120
        %v468 = vpop.permute.xlu0 %467
        %469 = vrot.lane.b32.xlu0 %v422, 120
        %v470 = vpop.permute.xlu0 %469
        %471 = vrot.lane.b32.xlu0 %v427, 120
        %v472 = vpop.permute.xlu0 %471
        %s477 = scalar_lea.vmem %s194, 96 [#allocation7]
        %478 = vst.msk [vmem:[%s477] sm:$0xff] %vm430, %v466
        %479 = vst.msk [vmem:[%s477 + $0x8] sm:$0xff] %vm430, %v468
        %480 = vst.msk [vmem:[%s477 + $0x10] sm:$0xff] %vm430, %v470
        %481 = vst.msk [vmem:[%s477 + $0x18] sm:$0xff] %vm430, %v472
        %s482 = sand.u32 %s91, 1
        %s483 = scalar_lea.sflag [#allocation4], %s482
        %s484 = sand.u32 %s91, 1
        %s485 = smul.addr %s484, 128
        %s486 = scalar_lea.vmem [#allocation7], %s485
        // Predicated region
        $region37: #{tpu_custom_call.1} parent=27 // pred_check
          %p487 = pneg %p101
        $region38: #{tpu_custom_call.1} parent=27 // pred_check_branch
          %489 = sbr.rel (%p487) target = $region40
        $region39: #{tpu_custom_call.1} parent=27 // pred_region
          %s490 = smul.u32 4, %s25
          %s492 = ssub.s32 2048, 2048
          %493 = vsyncadd %s483, %s492
          %s494 = smul.addr %s24, 16
          %s495 = sadd.s32 %s490, %s494
          %s496 = smul.addr %s495, 128
          %s497 = scalar_lea.hbm %s2, %s496
          %s498 = sshll.u32 %s486, 4
          %s499 = int_to_ptr.vmem [resolvable:$true] %s498
          %504 = dma.vmem_to_hbm [thread:$0]  %s499, 2048, %s497, %s483, 128, 128, 8
        $region40: #{tpu_custom_call.1} parent=27 // pred_fallthru
          _
      $region28: #{tpu_custom_call.1} parent=5 // pred_fallthru
        _
      %p505 = scmp.le.s32.totalorder 2, %s15
      // Predicated region
      $region41: #{tpu_custom_call.1} parent=5 // pred_check
        %p506 = pneg %p505
      $region42: #{tpu_custom_call.1} parent=5 // pred_check_branch
        %508 = sbr.rel (%p506) target = $region44
      $region43: #{tpu_custom_call.1} parent=5 // pred_region
        %s509 = ssub.s32 %s15, 2
        // Predicated region
        $region45: #{tpu_custom_call.1} parent=43 // pred_check
          %p510 = pneg %p107
        $region46: #{tpu_custom_call.1} parent=43 // pred_check_branch
          %512 = sbr.rel (%p510) target = $region48
        $region47: #{tpu_custom_call.1} parent=43 // pred_region
          %s513 = sand.u32 %s92, 1
          %s514 = scalar_lea.sflag [#allocation4], %s513
          %s515 = sand.u32 %s92, 1
          %s516 = smul.addr %s515, 128
          %s517 = scalar_lea.vmem [#allocation7], %s516
          %518 = dma.done %s514, 2048
        $region48: #{tpu_custom_call.1} parent=43 // pred_fallthru
          _
      $region44: #{tpu_custom_call.1} parent=5 // pred_fallthru
        _
    $region6: #{tpu_custom_call.1} parent=1 // loop_footer
      %s19 = sadd.s32 1, %s15
    $region7: #{tpu_custom_call.1} parent=1 // loop_footer_branch
      %14 = sbr.rel target = $region3
    $region8: #{tpu_custom_call.1} parent=1 // loop_exit
      _
    %519 = vsyncpa [#allocation3], 1
    %s520 = scalar_lea.sflag [#allocation3], 1
    %521 = vsyncpa %s520, 1
    %522 = vsyncpa [#allocation6], 1
    %523 = vsyncpa [#allocation4], 1
    %s524 = scalar_lea.sflag [#allocation4], 1
    %525 = vsyncpa %s524, 1

</llo_original>
